<compile_context>
chip_gen: v7x
topology: tpu7x:2x2x1
jax: 0.10.0
libtpu: 0.0.40
codegen_flags: <defaults>
</compile_context>

<pallas_src>
import functools
import math

import jax
import jax.numpy as jnp
import numpy as np
from jax.experimental import pallas as pl
from jax.experimental.pallas import tpu as pltpu


def _pe_kernel(freq_ref, phase_ref, o_ref, *, k: int):
    """o_ref tile: (ts, W) with W = k * d_model (k consecutive positions per row).

    angle[r, c] = ((row0 + r) * k) * freq[c] + phase'[c]
    phase' already contains the packed-slot offset (c // d_model) * freq[c]
    and the pi/2 shift for cosine columns, so the whole tile is a broadcast
    multiply-add plus a single transcendental per element.
    """
    ts = o_ref.shape[0]
    # Base position of each packed row: exact integer math, converted once.
    r = jax.lax.broadcasted_iota(jnp.int32, (ts, 1), 0)
    base = ((pl.program_id(0) * ts + r) * k).astype(jnp.float32)   # (ts, 1)
    # (ts,1) * (1,W) + (1,W)  ->  (ts,W)
    angle = base * freq_ref[...] + phase_ref[...]
    # NOTE: sin(x + pi/2) adds ~0.5 ulp(angle) extra rounding vs a true cos;
    # only matters for the highest-frequency columns at positions in the many
    # thousands, well below typical tolerances for this embedding.
    o_ref[...] = jnp.sin(angle)


@functools.lru_cache(maxsize=None)
def _pe_table(seq_len: int, d_model: int) -> jax.Array:
    """Builds the (seq_len, d_model) positional-encoding table with one kernel."""
    if d_model % 2 != 0:
        # The PyTorch reference itself errors for odd d_model (shape mismatch
        # on pe[:, 1::2]); odd d_model would also explode the packing factor.
        raise ValueError("d_model must be even")

    # Lane-dense packing: k consecutive positions per packed row so the lane
    # dimension W = k * d_model is a multiple of 128 (full-width unmasked
    # stores).  d_model even  =>  k <= 64.
    k = 128 // math.gcd(d_model, 128)
    width = k * d_model
    rows_total = -(-seq_len // k)                      # packed rows (positions padded to k)

    # Per-column frequency and folded phase: computed once on the host in
    # float64, rounded once to f32 (exp + integer-division hoisted out of the
    # kernel entirely).
    cols = np.arange(width)
    j = cols % d_model                                 # column within d_model
    slot = cols // d_model                             # packed position offset (0..k-1)
    freq = np.exp((2.0 * (j // 2)) * (-math.log(10000.0) / d_model))
    phase = slot * freq + np.where(j % 2 == 0, 0.0, math.pi / 2.0)
    freq = jnp.asarray(freq.reshape(1, width), dtype=jnp.float32)
    phase = jnp.asarray(phase.reshape(1, width), dtype=jnp.float32)

    # Row-tile size: ~4 MiB per output buffer (double-buffered by the
    # pipeline), multiple of 8, and at least 2 grid steps whenever
    # rows_total > 8 so both v7x TensorCores get work and writeback overlaps.
    bytes_per_row = width * 4
    budget_rows = max(8, ((4 * 1024 * 1024) // bytes_per_row) // 8 * 8)
    if rows_total <= 8:
        ts = rows_total                                # full extent (valid block shape)
    else:
        half = -(-rows_total // 2)
        half = ((half + 7) // 8) * 8                   # round up to multiple of 8
        ts = min(budget_rows, half)
    grid = (pl.cdiv(rows_total, ts),)

    kernel = functools.partial(_pe_kernel, k=k)
    pe_packed = pl.pallas_call(
        kernel,
        out_shape=jax.ShapeDtypeStruct((rows_total, width), jnp.float32),
        grid=grid,
        in_specs=[
            pl.BlockSpec((1, width), lambda i: (0, 0)),
            pl.BlockSpec((1, width), lambda i: (0, 0)),
        ],
        out_specs=pl.BlockSpec((ts, width), lambda i: (i, 0)),
        compiler_params=pltpu.CompilerParams(
            dimension_semantics=("parallel",),
            vmem_limit_bytes=32 * 1024 * 1024,
        ),
        cost_estimate=pl.CostEstimate(
            flops=3 * rows_total * width,
            transcendentals=rows_total * width,
            bytes_accessed=rows_total * width * 4 + 2 * width * 4,
        ),
    )(freq, phase)

    if k == 1:
        return pe_packed                               # already (seq_len, d_model)
    pe = pe_packed.reshape(rows_total * k, d_model)    # contiguous reshape: no copy
    if rows_total * k != seq_len:
        pe = pe[:seq_len]                              # only copies when seq % k != 0
    return pe


def positional_embedding(x: jax.Array, d_model: int) -> jax.Array:
    """Forward of PositionalEmbedding: pe[:, :x.shape[1]] with shape (1, S, d_model)."""
    return _pe_table(x.shape[1], d_model)[None, :, :]


def _reference_pe(seq_len: int, d_model: int):
    pe = np.zeros((seq_len, d_model), dtype=np.float32)
    position = np.arange(0, seq_len, dtype=np.float32)[:, None]
    div_term = np.exp(np.arange(0, d_model, 2, dtype=np.float32)
                      * -(math.log(10000.0) / d_model))
    pe[:, 0::2] = np.sin(position * div_term)
    pe[:, 1::2] = np.cos(position * div_term)
    return pe[None, :, :]


if __name__ == "__main__":
    key = jax.random.PRNGKey(0)

    # Primary case: x (batch, seq, d_model); only seq is used by forward().
    B, S, D = 2, 8, 32
    x = jax.random.normal(key, (B, S, D), dtype=jnp.float32)
    out = jax.block_until_ready(positional_embedding(x, d_model=D))
    assert out.shape == (1, S, D), out.shape
    np.testing.assert_allclose(np.asarray(out), _reference_pe(S, D), rtol=1e-5, atol=1e-5)

    # Sequence not divisible by the packing factor (k = 4 for d_model = 32).
    S2 = 10
    x2 = jax.random.normal(key, (1, S2, D), dtype=jnp.float32)
    out2 = jax.block_until_ready(positional_embedding(x2, d_model=D))
    assert out2.shape == (1, S2, D), out2.shape
    np.testing.assert_allclose(np.asarray(out2), _reference_pe(S2, D), rtol=1e-5, atol=1e-5)

    # d_model already a multiple of 128: k == 1 path, multi-step grid (>=2 tiles).
    D3, S3 = 128, 16
    x3 = jax.random.normal(key, (1, S3, D3), dtype=jnp.float32)
    out3 = jax.block_until_ready(positional_embedding(x3, d_model=D3))
    assert out3.shape == (1, S3, D3), out3.shape
    np.testing.assert_allclose(np.asarray(out3), _reference_pe(S3, D3), rtol=1e-5, atol=1e-5)

    print("KERNEL_OK")
</pallas_src>

<mosaic_0001>
module attributes {stable_mosaic.version = 11 : i64} {
  func.func @_pe_kernel(%arg0: i32, %arg1: memref<1x128xf32, #tpu.memory_space<vmem>>, %arg2: memref<1x128xf32, #tpu.memory_space<vmem>>, %arg3: memref<2x128xf32, #tpu.memory_space<vmem>>) attributes {dimension_semantics = [#tpu.dimension_semantics<parallel>], iteration_bounds = array<i64: 1>, scalar_prefetch = 0 : i64, scratch_operands = 0 : i64, tpu.core_type = #tpu.core_type<tc>, window_params = [{pipeline_mode = #tpu.pipeline_mode<synchronous>, transform_indices = @transform_0, window_bounds = array<i64: 1, 128>}, {pipeline_mode = #tpu.pipeline_mode<synchronous>, transform_indices = @transform_1, window_bounds = array<i64: 1, 128>}, {transform_indices = @transform_2, window_bounds = array<i64: 2, 128>}]} {
    %0 = tpu.iota {dimensions = array<i32: 0>} : vector<2x1xi32>
    %c2_i32 = arith.constant 2 : i32
    %1 = arith.muli %arg0, %c2_i32 : i32
    %2 = vector.broadcast %1 : i32 to vector<2x1xi32>
    %3 = arith.addi %2, %0 : vector<2x1xi32>
    %c4_i32 = arith.constant 4 : i32
    %4 = vector.broadcast %c4_i32 : i32 to vector<2x1xi32>
    %5 = arith.muli %3, %4 : vector<2x1xi32>
    %6 = arith.sitofp %5 : vector<2x1xi32> to vector<2x1xf32>
    %c0 = arith.constant 0 : index
    %c0_0 = arith.constant 0 : index
    %7 = vector.load %arg1[%c0, %c0_0] : memref<1x128xf32, #tpu.memory_space<vmem>>, vector<1x128xf32>
    %8 = vector.broadcast %6 : vector<2x1xf32> to vector<2x128xf32>
    %9 = vector.broadcast %7 : vector<1x128xf32> to vector<2x128xf32>
    %10 = arith.mulf %8, %9 : vector<2x128xf32>
    %c0_1 = arith.constant 0 : index
    %c0_2 = arith.constant 0 : index
    %11 = vector.load %arg2[%c0_1, %c0_2] : memref<1x128xf32, #tpu.memory_space<vmem>>, vector<1x128xf32>
    %12 = vector.broadcast %11 : vector<1x128xf32> to vector<2x128xf32>
    %13 = arith.addf %10, %12 : vector<2x128xf32>
    %14 = math.sin %13 : vector<2x128xf32>
    %c0_3 = arith.constant 0 : index
    %c0_4 = arith.constant 0 : index
    %15 = vector.load %arg3[%c0_3, %c0_4] : memref<2x128xf32, #tpu.memory_space<vmem>>, vector<2x128xf32>
    tpu.vector_store %arg3[%c0_3, %c0_4], %14 {strides = array<i32>} : memref<2x128xf32, #tpu.memory_space<vmem>>, vector<2x128xf32>,
    return
  }
  func.func @transform_0(%arg0: i32) -> (i32, i32) {
    %c0_i32 = arith.constant 0 : i32
    %c0_i32_0 = arith.constant 0 : i32
    %c0_i32_1 = arith.constant 0 : i32
    return %c0_i32, %c0_i32_0 : i32, i32
  }
  func.func @transform_1(%arg0: i32) -> (i32, i32) {
    %c0_i32 = arith.constant 0 : i32
    %c0_i32_0 = arith.constant 0 : i32
    %c0_i32_1 = arith.constant 0 : i32
    return %c0_i32, %c0_i32_0 : i32, i32
  }
  func.func @transform_2(%arg0: i32) -> (i32, i32) {
    %c0_i32 = arith.constant 0 : i32
    %c0_i32_0 = arith.constant 0 : i32
    return %arg0, %c0_i32 : i32, i32
  }
}

</mosaic_0001>

<llo_original>
// kernel: tpu_custom_call.1
$region0: #{tpu_custom_call.1}
  #allocation0 [shape = 'u32[]', space=smem, size = 0x4, offset = 0x4, fixed_abs, tag = 'smem constant byte address 0x4 - core index']
  #allocation1 [shape = 'u32[144,128]{1,0:T(1,128)}', space=vmem, size = 0x12000, scoped, tag = 'internal scratch']
  %s0 = inlined_call_operand.hbm [shape: f32[1,128], index: 0, kind: input, shape index: {}]
  %s1 = inlined_call_operand.vmem [shape: f32[1,128], index: 1, kind: input, shape index: {}]
  %s2 = inlined_call_operand.hbm [shape: f32[2,128], index: 2, kind: output, shape index: {}]
  %s3 = sld [smem:[#allocation0]]
  $region22: #{tpu_custom_call.1} parent=0
    _
  %s5 = ssub.s32 1, %s3
  %s6 = scalar_select 0, %s5, %s3
  $region1: #{tpu_custom_call.1} parent=0
    #allocation2 [shape = 'u8[512]{0}', space=vmem, size = 0x400, scoped, tag = 'input window, operand 0, single buffered']
    #allocation3 [shape = 's32[1]{0}', space=sflag, size = 0x4, scoped, tag = 'scoped memory for tpu_custom_call.1']
    #allocation4 [shape = 's32[1]{0}', space=sflag, size = 0x4, scoped, tag = 'scoped memory for tpu_custom_call.1']
    #allocation5 [shape = 'u8[1024]{0}', space=vmem, size = 0x400, scoped, tag = 'output window, operand 0, single buffered']
    %7 = vsyncpa [#allocation3], 0
    %8 = vsyncpa [#allocation4], 0
    // Predicated region
    $region2: #{tpu_custom_call.1} parent=1 // pred_check
      _
    $region3: #{tpu_custom_call.1} parent=1 // pred_check_branch
      %10 = sbr.rel (0) target = $region5
    $region4: #{tpu_custom_call.1} parent=1 // pred_region
      %s12 = ssub.s32 16, 16
      %13 = vsyncadd [#allocation3], %s12
      %s15 = sshll.u32 [#allocation2], 4
      %s16 = int_to_ptr.vmem [resolvable:$true] %s15
      %18 = dma.hbm_to_vmem [thread:$0]  %s0, 16, %s16, [#allocation3]
    $region5: #{tpu_custom_call.1} parent=1 // pred_fallthru
      _
    // Predicated region
    $region6: #{tpu_custom_call.1} parent=1 // pred_check
      _
    $region7: #{tpu_custom_call.1} parent=1 // pred_check_branch
      %20 = sbr.rel (0) target = $region9
    $region8: #{tpu_custom_call.1} parent=1 // pred_region
      _
    $region9: #{tpu_custom_call.1} parent=1 // pred_fallthru
      _
    // Predicated region
    $region10: #{tpu_custom_call.1} parent=1 // pred_check
      _
    $region11: #{tpu_custom_call.1} parent=1 // pred_check_branch
      %22 = sbr.rel (0) target = $region13
    $region12: #{tpu_custom_call.1} parent=1 // pred_region
      %23 = dma.done [#allocation3], 16
    $region13: #{tpu_custom_call.1} parent=1 // pred_fallthru
      _
    %v24 = vlaneseq
    %v25 = vshrl.u32 %v24, 7
    %s26 = smul.u32 0, 2
    %v27 = vstv %s26
    %v28 = vadd.s32 %v27, %v25
    %v29 = vmul.u32 %v28, 4
    %v30 = vcvt.s32.f32 %v29
    %v31 = vld [vmem:[#allocation2] sm:$0x1]
    %v33 = vlaneseq
    %v34 = vshrl.u32 %v33, 7
    %v35 = vsub.s32 0, %v34
    %v36 = vrot.slane %v31, %v35
    %v38 = vmul.f32 %v30, %v36
    %v39 = vld [vmem:[%s1] sm:$0x1]
    %v41 = vlaneseq
    %v42 = vshrl.u32 %v41, 7
    %v43 = vsub.s32 0, %v42
    %v44 = vrot.slane %v39, %v43
    %v46 = vadd.f32 %v38, %v44
    %v47 = vand.u32 2147483647, %v46
    %vm48 = vcmp.le.f32.partialorder %v47, 0.7853982
    %vm49 = vcmp.lt.s32.totalorder %v46, 0
    %v50 = vand.u32 %v46, 2139095040
    %v51 = vshrl.u32 %v50, 23
    %v52 = vsub.s32 %v51, 127
    %v53 = vand.u32 2147483647, %v46
    %v54 = vand.u32 %v53, 8388607
    %v55 = vor.u32 %v54, 8388608
    %v56 = vsub.s32 0, %v55
    %v57 = vadd.s32 %v52, 1
    %vm58 = vcmp.gt.s32.totalorder %v57, 0
    %v59 = vsel %vm58, %v57, 0
    %v60 = vshrl.u32 %v59, 5
    %v61 = vand.u32 %v59, 31
    %v62 = vsub.s32 32, %v61
    %v63 = vshrl.u32 683565275, %v62
    %v64 = vshll.u32 683565275, %v61
    %v65 = vshrl.u32 2475754826, %v62
    %v66 = vor.u32 %v64, %v65
    %v67 = vshll.u32 2475754826, %v61
    %v68 = vshrl.u32 2131351028, %v62
    %v69 = vor.u32 %v67, %v68
    %v70 = vshll.u32 2131351028, %v61
    %v71 = vshrl.u32 2102212464, %v62
    %v72 = vor.u32 %v70, %v71
    %v73 = vshll.u32 2102212464, %v61
    %v74 = vshrl.u32 920167782, %v62
    %v75 = vor.u32 %v73, %v74
    %v76 = vshll.u32 920167782, %v61
    %v77 = vshrl.u32 1326507024, %v62
    %v78 = vor.u32 %v76, %v77
    %vm79 = vcmp.lt.s32.totalorder %v60, 1
    %vm80 = vcmp.lt.s32.totalorder %v60, 2
    %vm81 = vcmp.lt.s32.totalorder %v60, 3
    %vm82 = vcmp.lt.s32.totalorder %v60, 4
    %v83 = vsel %vm79, %v63, %v66
    %v84 = vsel %vm82, %v72, 2102212464
    %v85 = vsel %vm81, %v69, %v84
    %v86 = vsel %vm80, %v83, %v85
    %v87 = vsel %vm79, %v66, %v69
    %v88 = vsel %vm82, %v75, 920167782
    %v89 = vsel %vm81, %v72, %v88
    %v90 = vsel %vm80, %v87, %v89
    %v91 = vsel %vm79, %v69, %v72
    %v92 = vsel %vm82, %v78, 1326507024
    %v93 = vsel %vm81, %v75, %v92
    %v94 = vsel %vm80, %v91, %v93
    %v95 = vshll.u32 %v55, 8
    %v96 = vmul.u32.u64.compose %v95, %v94
    %v97 = vextract.low.u32 %v96
    %v98 = vextract.high.u32 %v96
    %v99 = vmul.u32.u64.compose %v95, %v90
    %v100 = vextract.low.u32 %v99
    %v101 = vextract.high.u32 %v99
    %v102 = vmul.u32 %v95, %v86
    %v103 = vadd.s32 %v98, %v100
    %vm104 = vc.u32 %v98, %v100
    %v105 = vadd.s32 %v101, 1
    %v106 = vsel %vm104, %v105, %v101
    %v107 = vadd.s32 %v102, %v106
    %v108 = vadd.s32 %v107, 536870912
    %v109 = vshrl.u32 %v108, 30
    %v110 = vshll.u32 %v109, 30
    %v111 = vsub.s32 %v107, %v110
    %vm112 = vcmp.lt.s32.totalorder %v111, 0
    %v113 = vsub.s32 0, %v111
    %v114 = vsel %vm112, %v113, %v111
    %v115 = vclz %v114
    %v116 = vsub.s32 %v115, 2
    %vm117 = vcmp.gt.s32.totalorder 0, %v116
    %v118 = vsel %vm117, 0, %v116
    %v119 = vsub.s32 32, %v118
    %v120 = vshll.u32 %v111, %v118
    %v121 = vshrl.u32 %v103, %v119
    %v122 = vor.u32 %v120, %v121
    %v123 = vsub.s32 4294967266, %v118
    %v124 = vadd.s32 %v123, 127
    %v125 = vshll.u32 %v124, 23
    %v126 = vor.u32 4788187, %v125
    %v127 = vand.u32 2147483647, %v126
    %v129 = vcvt.s32.f32 %v122
    %v130 = vmul.f32 %v129, %v127
    %v131 = vxor.u32 %v130, 2147483648
    %v132 = vsel %vm49, %v131, %v130
    %v133 = vsub.s32 4, %v109
    %v134 = vsel %vm49, %v133, %v109
    %v135 = vsel %vm48, %v46, %v132
    %v136 = vsel %vm48, 0, %v134
    %v137 = vcosq.f32.pop %v135
    %v138 = vsinq.f32.pop %v135
    %vm139 = vweird.f32 %v46
    %v140 = vadd.s32 %v136, 3
    %v141 = vand.u32 %v140, 3
    %vm142 = vcmp.lt.s32.totalorder %v141, 2
    %vm143 = vcmp.eq.s32.totalorder %v141, 0
    %v144 = vxor.u32 %v138, 2147483648
    %v145 = vsel %vm143, %v137, %v144
    %vm146 = vcmp.eq.s32.totalorder %v141, 2
    %v147 = vxor.u32 %v137, 2147483648
    %v148 = vsel %vm146, %v147, %v138
    %v149 = vsel %vm142, %v145, %v148
    %v150 = vsel %vm139, nan, %v149
    %151 = vst [vmem:[#allocation5] sm:$0x3] %v150
    // Predicated region
    $region14: #{tpu_custom_call.1} parent=1 // pred_check
      _
    $region15: #{tpu_custom_call.1} parent=1 // pred_check_branch
      %153 = sbr.rel (0) target = $region17
    $region16: #{tpu_custom_call.1} parent=1 // pred_region
      %s155 = ssub.s32 32, 32
      %156 = vsyncadd [#allocation4], %s155
      %s158 = sshll.u32 [#allocation5], 4
      %s159 = int_to_ptr.vmem [resolvable:$true] %s158
      %161 = dma.vmem_to_hbm [thread:$0]  %s159, 32, %s2, [#allocation4]
    $region17: #{tpu_custom_call.1} parent=1 // pred_fallthru
      _
    // Predicated region
    $region18: #{tpu_custom_call.1} parent=1 // pred_check
      _
    $region19: #{tpu_custom_call.1} parent=1 // pred_check_branch
      %163 = sbr.rel (0) target = $region21
    $region20: #{tpu_custom_call.1} parent=1 // pred_region
      %164 = dma.done [#allocation4], 32
    $region21: #{tpu_custom_call.1} parent=1 // pred_fallthru
      _
    %165 = vsyncpa [#allocation3], 1
    %166 = vsyncpa [#allocation4], 1

</llo_original>
